<compile_context>
chip_gen: v7x
topology: tpu7x:2x2x1
jax: 0.10.0
libtpu: 0.0.40
codegen_flags: <defaults>
</compile_context>

<pallas_src>
import jax
import jax.numpy as jnp
from jax import lax
from jax.experimental import pallas as pl
from jax.experimental.pallas import tpu as pltpu


def _round_up(x, m):
    return ((x + m - 1) // m) * m


def _weighted_ce_kernel(logits_ref, tgt_ref, out_ref):
    """One (partition, row-tile) grid step of unweighted CE lane sums.

    logits_ref: (TR, V) model dtype -- one tile of rows of one layer
    tgt_ref:    (TR, 1) int32       -- targets (-100 = ignore / row padding)
    out_ref:    (1, V)  float32     -- per-partition, per-lane CE partial sums
    """
    i = pl.program_id(1)  # row-tile index (reduction axis)

    @pl.when(i == 0)
    def _():
        out_ref[...] = jnp.zeros_like(out_ref)

    logits = logits_ref[...].astype(jnp.float32)            # (TR, V)
    tgt = tgt_ref[...]                                       # (TR, 1) int32

    TR, V = logits.shape
    col = lax.broadcasted_iota(jnp.int32, (TR, V), 1)

    # stable log-sum-exp per row
    m = jnp.max(logits, axis=-1, keepdims=True)
    lse = m + jnp.log(jnp.sum(jnp.exp(logits - m), axis=-1, keepdims=True))

    # For lane t: sum over rows whose target is t of (lse - logit_t).
    # jnp.where select (not mask-multiply): no bool->f32 cast, no full-tile
    # vmul, and NaN/Inf in ignored / out-of-bounds rows cannot leak through.
    contrib = jnp.where(col == tgt, lse - logits, 0.0)       # (TR, V)
    out_ref[...] += jnp.sum(contrib, axis=0, keepdims=True)  # (1, V)


def weighted_ce_sum_pallas(logits, targets, weight,
                           *, max_tile_rows=4096, vmem_budget=32 << 20):
    """sum_i weight[t_i] * CE(logits_i, t_i) over rows with t_i != -100.

    logits:  (N, V) any float dtype (streamed in native dtype)
    targets: (N,)   int, -100 = ignore
    weight:  (V,)   float per-class weights
    Returns a float32 scalar.
    """
    N, V = logits.shape
    itemsize = jnp.dtype(logits.dtype).itemsize
    sub = {1: 32, 2: 16}.get(itemsize, 8)      # dtype sublane packing
    Vl = _round_up(V, 128)                     # lane-padded VMEM footprint

    # Per-row VMEM bytes: double-buffered input + ~2 full-tile f32 temporaries.
    row_bytes = Vl * (2 * itemsize + 2 * 4)
    tr = max(sub, (vmem_budget // row_bytes) // sub * sub)

    P = 2  # row-split "parallel" partitions (keeps both v7x TCs busy; harmless on 1-TC chips)
    tr = min(tr, max_tile_rows, _round_up(pl.cdiv(N, P), sub))
    n_tiles = pl.cdiv(pl.cdiv(N, P), tr)
    if P * n_tiles * tr - N >= tr:
        # The split would create a fully out-of-bounds tail block (tiny N):
        # fall back to a single partition (last block is at most partially OOB).
        P = 1
        n_tiles = pl.cdiv(N, tr)
    Np = P * n_tiles * tr

    # Only the tiny int32 target vector is padded (-100 => contributes 0);
    # the logits are NOT padded or copied — the partial tail block's OOB rows
    # are masked by the target select inside the kernel.
    tgt = targets.reshape(-1).astype(jnp.int32)
    if Np != N:
        tgt = jnp.pad(tgt, (0, Np - N), constant_values=-100)
    tgt2d = tgt.reshape(Np, 1)

    out = pl.pallas_call(
        _weighted_ce_kernel,
        out_shape=jax.ShapeDtypeStruct((P, 1, V), jnp.float32),
        grid=(P, n_tiles),
        in_specs=[
            pl.BlockSpec((tr, V), lambda p, i: (p * n_tiles + i, 0)),
            pl.BlockSpec((tr, 1), lambda p, i: (p * n_tiles + i, 0)),
        ],
        out_specs=pl.BlockSpec((None, 1, V), lambda p, i: (p, 0, 0)),
        compiler_params=pltpu.CompilerParams(
            dimension_semantics=("parallel", "arbitrary"),
            vmem_limit_bytes=48 << 20,
        ),
    )(logits, tgt2d)

    # Class weight applied once per lane in the (tiny) JAX epilogue.
    return jnp.sum(jnp.sum(out, axis=(0, 1)) * weight.astype(jnp.float32))


class SetCriterionPallas:
    """JAX/Pallas port of Pix2Seq SetCriterion (loss_type='ce', world_size=1)."""

    def __init__(self, num_vocal, eos_coef, loss_type="ce"):
        assert loss_type == "ce", "only 'ce' loss_type implemented"
        self.num_vocal = num_vocal
        self.loss_type = loss_type
        # empty_weight = ones(num_vocal); empty_weight[-1] = eos_coef
        self.empty_weight = jnp.ones((num_vocal,), jnp.float32).at[-1].set(eos_coef)

    def __call__(self, outputs, target_seq):
        pred = outputs["pred_seq_logits"]                  # (B, L, num_vocal)
        flat_tgt = target_seq.reshape(-1).astype(jnp.int32)

        # num_pos = clamp((target_seq > -1).sum(), min=1); world_size == 1.
        num_pos = jnp.maximum(jnp.sum((flat_tgt > -1).astype(jnp.float32)), 1.0)

        # One pallas_call per decoder layer: logits stream straight from the
        # model output (free reshape), no jnp.stack / jnp.pad HBM copies.
        losses = {
            "loss_seq": weighted_ce_sum_pallas(
                pred.reshape(-1, self.num_vocal), flat_tgt, self.empty_weight
            ) / num_pos
        }
        aux = outputs.get("aux_seq_logits", None)
        if aux is not None:
            for i, a in enumerate(aux):
                losses["loss_%d" % i] = weighted_ce_sum_pallas(
                    a.reshape(-1, self.num_vocal), flat_tgt, self.empty_weight
                ) / num_pos
        return losses


def _ref_weighted_ce(logits, targets, weight):
    """Pure-JAX reference of F.cross_entropy(weight=w, reduction='sum', ignore_index=-100)."""
    logp = jax.nn.log_softmax(logits.astype(jnp.float32), axis=-1)
    valid = targets != -100
    t = jnp.where(valid, targets, 0)
    nll = -jnp.take_along_axis(logp, t[:, None], axis=-1)[:, 0]
    w = weight[t]
    loss = jnp.sum(jnp.where(valid, w * nll, 0.0))
    cnt = jnp.sum((targets > -1).astype(jnp.float32))
    return loss, cnt


if __name__ == "__main__":
    key = jax.random.PRNGKey(0)
    # L=9 makes N=18 rows: exercises the partial (out-of-bounds-padded) tail
    # tile as well as the non-128-multiple vocab (V=200) full-extent block.
    B, L, V = 2, 9, 200
    eos_coef = 0.1

    k1, k2, k3 = jax.random.split(key, 3)
    pred_logits = jax.random.normal(k1, (B, L, V), jnp.float32)
    aux_logits = jax.random.normal(k3, (B, L, V), jnp.float32)
    target_seq = jax.random.randint(k2, (B, L), 0, V, jnp.int32)
    target_seq = target_seq.at[:, -2:].set(-100)   # padded / ignored positions

    criterion = SetCriterionPallas(num_vocal=V, eos_coef=eos_coef)
    outputs = {"pred_seq_logits": pred_logits, "aux_seq_logits": [aux_logits]}

    losses = criterion(outputs, target_seq)
    jax.block_until_ready(losses)

    # correctness check against pure-JAX reference
    ew = criterion.empty_weight
    ref_loss, ref_cnt = _ref_weighted_ce(pred_logits.reshape(-1, V),
                                         target_seq.reshape(-1), ew)
    ref_num_pos = jnp.maximum(ref_cnt, 1.0)
    ref_seq = ref_loss / ref_num_pos
    ref_aux, _ = _ref_weighted_ce(aux_logits.reshape(-1, V),
                                  target_seq.reshape(-1), ew)
    ref_aux = ref_aux / ref_num_pos

    assert jnp.allclose(losses["loss_seq"], ref_seq, rtol=1e-5, atol=1e-5), \
        (losses["loss_seq"], ref_seq)
    assert jnp.allclose(losses["loss_0"], ref_aux, rtol=1e-5, atol=1e-5), \
        (losses["loss_0"], ref_aux)

    print("KERNEL_OK")
</pallas_src>

<mosaic_0001>
module attributes {stable_mosaic.version = 11 : i64} {
  func.func @_weighted_ce_kernel(%arg0: i32, %arg1: i32, %arg2: memref<16x200xf32, #tpu.memory_space<vmem>>, %arg3: memref<16x1xi32, #tpu.memory_space<vmem>>, %arg4: memref<1x1x200xf32, #tpu.memory_space<vmem>>) attributes {dimension_semantics = [#tpu.dimension_semantics<parallel>, #tpu.dimension_semantics<arbitrary>], iteration_bounds = array<i64: 2, 1>, scalar_prefetch = 0 : i64, scratch_operands = 0 : i64, tpu.core_type = #tpu.core_type<tc>, window_params = [{transform_indices = @transform_0, window_bounds = array<i64: 16, 200>}, {transform_indices = @transform_1, window_bounds = array<i64: 16, 1>}, {transform_indices = @transform_2, window_bounds = array<i64: 1, 1, 200>}]} {
    %c0_i32 = arith.constant 0 : i32
    %0 = arith.cmpi eq, %arg1, %c0_i32 : i32
    %1 = arith.extui %0 : i1 to i32
    %c0_i32_0 = arith.constant 0 : i32
    %2 = arith.cmpi ne, %1, %c0_i32_0 : i32
    scf.if %2 {
      %cst_13 = arith.constant 0.000000e+00 : f32
      %29 = vector.broadcast %cst_13 : f32 to vector<1x200xf32>
      %c0_14 = arith.constant 0 : index
      %c0_15 = arith.constant 0 : index
      %c0_16 = arith.constant 0 : index
      %30 = vector.load %arg4[%c0_14, %c0_15, %c0_16] : memref<1x1x200xf32, #tpu.memory_space<vmem>>, vector<1x1x200xf32>
      %31 = vector.shape_cast %30 : vector<1x1x200xf32> to vector<1x200xf32>
      %32 = vector.shape_cast %29 : vector<1x200xf32> to vector<1x1x200xf32>
      tpu.vector_store %arg4[%c0_14, %c0_15, %c0_16], %32 {strides = array<i32>} : memref<1x1x200xf32, #tpu.memory_space<vmem>>, vector<1x1x200xf32>,
    } else {
    }
    %c0 = arith.constant 0 : index
    %c0_1 = arith.constant 0 : index
    %3 = vector.load %arg2[%c0, %c0_1] : memref<16x200xf32, #tpu.memory_space<vmem>>, vector<16x200xf32>
    %c0_2 = arith.constant 0 : index
    %c0_3 = arith.constant 0 : index
    %4 = vector.load %arg3[%c0_2, %c0_3] : memref<16x1xi32, #tpu.memory_space<vmem>>, vector<16x1xi32>
    %5 = tpu.iota {dimensions = array<i32: 1>} : vector<16x200xi32>
    %cst = arith.constant dense<0xFF800000> : vector<16xf32>
    %6 = vector.multi_reduction <maximumf>, %3, %cst [1] : vector<16x200xf32> to vector<16xf32>
    %7 = vector.shape_cast %6 : vector<16xf32> to vector<16x1xf32>
    %8 = vector.broadcast %7 : vector<16x1xf32> to vector<16x200xf32>
    %9 = arith.subf %3, %8 : vector<16x200xf32>
    %10 = math.exp %9 : vector<16x200xf32>
    %cst_4 = arith.constant dense<0.000000e+00> : vector<16xf32>
    %11 = vector.multi_reduction <add>, %10, %cst_4 [1] : vector<16x200xf32> to vector<16xf32>
    %12 = vector.shape_cast %11 : vector<16xf32> to vector<16x1xf32>
    %13 = math.log %12 : vector<16x1xf32>
    %14 = arith.addf %7, %13 : vector<16x1xf32>
    %15 = vector.broadcast %4 : vector<16x1xi32> to vector<16x200xi32>
    %16 = arith.cmpi eq, %5, %15 : vector<16x200xi32>
    %17 = vector.broadcast %14 : vector<16x1xf32> to vector<16x200xf32>
    %18 = arith.subf %17, %3 : vector<16x200xf32>
    %cst_5 = arith.constant 0.000000e+00 : f32
    %19 = vector.broadcast %cst_5 : f32 to vector<16x200xf32>
    %20 = arith.select %16, %18, %19 : vector<16x200xi1>, vector<16x200xf32>
    %c0_6 = arith.constant 0 : index
    %c0_7 = arith.constant 0 : index
    %c0_8 = arith.constant 0 : index
    %21 = vector.load %arg4[%c0_6, %c0_7, %c0_8] : memref<1x1x200xf32, #tpu.memory_space<vmem>>, vector<1x1x200xf32>
    %22 = vector.shape_cast %21 : vector<1x1x200xf32> to vector<1x200xf32>
    %cst_9 = arith.constant dense<0.000000e+00> : vector<200xf32>
    %23 = vector.multi_reduction <add>, %20, %cst_9 [0] : vector<16x200xf32> to vector<200xf32>
    %24 = vector.shape_cast %23 : vector<200xf32> to vector<1x200xf32>
    %25 = arith.addf %22, %24 : vector<1x200xf32>
    %c0_10 = arith.constant 0 : index
    %c0_11 = arith.constant 0 : index
    %c0_12 = arith.constant 0 : index
    %26 = vector.load %arg4[%c0_10, %c0_11, %c0_12] : memref<1x1x200xf32, #tpu.memory_space<vmem>>, vector<1x1x200xf32>
    %27 = vector.shape_cast %26 : vector<1x1x200xf32> to vector<1x200xf32>
    %28 = vector.shape_cast %25 : vector<1x200xf32> to vector<1x1x200xf32>
    tpu.vector_store %arg4[%c0_10, %c0_11, %c0_12], %28 {strides = array<i32>} : memref<1x1x200xf32, #tpu.memory_space<vmem>>, vector<1x1x200xf32>,
    return
  }
  func.func @transform_0(%arg0: i32, %arg1: i32) -> (i32, i32) {
    %c1_i32 = arith.constant 1 : i32
    %0 = arith.muli %arg0, %c1_i32 : i32
    %1 = arith.addi %0, %arg1 : i32
    %c0_i32 = arith.constant 0 : i32
    %c0_i32_0 = arith.constant 0 : i32
    return %1, %c0_i32 : i32, i32
  }
  func.func @transform_1(%arg0: i32, %arg1: i32) -> (i32, i32) {
    %c1_i32 = arith.constant 1 : i32
    %0 = arith.muli %arg0, %c1_i32 : i32
    %1 = arith.addi %0, %arg1 : i32
    %c0_i32 = arith.constant 0 : i32
    %c0_i32_0 = arith.constant 0 : i32
    return %1, %c0_i32 : i32, i32
  }
  func.func @transform_2(%arg0: i32, %arg1: i32) -> (i32, i32, i32) {
    %c0_i32 = arith.constant 0 : i32
    %c0_i32_0 = arith.constant 0 : i32
    %c0_i32_1 = arith.constant 0 : i32
    return %arg0, %c0_i32, %c0_i32_0 : i32, i32, i32
  }
}

</mosaic_0001>

<llo_original>
// kernel: tpu_custom_call.1
$region0: #{tpu_custom_call.1}
  #allocation0 [shape = 'u32[]', space=smem, size = 0x4, offset = 0x4, fixed_abs, tag = 'smem constant byte address 0x4 - core index']
  #allocation1 [shape = 'u32[144,128]{1,0:T(1,128)}', space=vmem, size = 0x12000, scoped, tag = 'internal scratch']
  %s0 = inlined_call_operand.hbm [shape: f32[18,200], index: 0, kind: input, shape index: {}]
  %s1 = inlined_call_operand.vmem [shape: s32[32,1], index: 1, kind: input, shape index: {}]
  %s2 = inlined_call_operand.hbm [shape: f32[2,1,200], index: 2, kind: output, shape index: {}]
  %s3 = sld [smem:[#allocation0]]
  $region49: #{tpu_custom_call.1} parent=0
    _
  %s5 = ssub.s32 1, %s3
  %s6 = scalar_select 0, %s5, %s3
  $region1: #{tpu_custom_call.1} parent=0
    #allocation2 [shape = 'u8[32768]{0}', space=vmem, size = 0x8000, scoped, tag = 'input window, operand 0']
    #allocation3 [shape = 's32[2]{0}', space=sflag, size = 0x8, scoped, tag = 'scoped memory for tpu_custom_call.1']
    #allocation4 [shape = 's32[2]{0}', space=sflag, size = 0x8, scoped, tag = 'scoped memory for tpu_custom_call.1']
    #allocation5 [shape = 'u8[2048]{0}', space=vmem, size = 0x800, scoped, tag = 'output window, operand 0']
    %7 = vsyncpa [#allocation3], 0
    %s8 = scalar_lea.sflag [#allocation3], 1
    %9 = vsyncpa %s8, 0
    %10 = vsyncpa [#allocation4], 0
    %s11 = scalar_lea.sflag [#allocation4], 1
    %12 = vsyncpa %s11, 0
    loop: start=0, step=1, limit=4
    $region2: #{tpu_custom_call.1} parent=1 // loop_pre_header
      _
    $region3: #{tpu_custom_call.1} parent=1 // loop_header
      %s14 = sphi 0, %s18
      %p15 = scmp.ge.s32.totalorder %s14, 4
      %s21 = sphi 0, %s33
      %s22 = sphi 0, %s29
      %s23 = sphi 0, %s21
      %s24 = sphi 0, %s22
      %s25 = sphi 0, %s23
      %s26 = sphi 0, %s24
      %s38 = sphi 0, %s40
      %s41 = sphi 0, %s38
      %s42 = sphi 0, %s41
      %s58 = sphi 0, %s42
      %s66 = sphi 0, %s68
      %s69 = sphi 0, %s66
      %s70 = sphi 0, %s69
      %s86 = sphi 0, %s70
      %s92 = sphi 0, %s94
      %s95 = sphi 0, %s92
      %s96 = sphi 0, %s95
      %s112 = sphi 0, %s96
    $region4: #{tpu_custom_call.1} parent=1 // loop_header_branch
      %17 = sbr.rel (%p15) target = $region8
    $region5: #{tpu_custom_call.1} parent=1 // loop_body
      %s19 = ssub.s32 %s14, 1
      %s20 = ssub.s32 %s14, 2
      %s27 = sadd.s32 1, %s22
      %p28 = scmp.ge.s32.totalorder %s27, 1
      %s29 = scalar_select %p28, 0, %s27
      %s30 = sadd.s32 1, %s21
      %s31 = scalar_select %p28, %s30, %s21
      %p32 = scmp.ge.s32.totalorder %s31, 2
      %s33 = scalar_select %p32, 0, %s31
      %s34 = sadd.s32 %s21, %s22
      %s35 = sadd.s32 %s33, %s29
      %s36 = ssub.s32 %s34, %s35
      %p37 = scmp.eq.s32.totalorder %s36, 0
      %s39 = sadd.s32 %s38, 1
      %s40 = scalar_select %p37, %s38, %s39
      %p43 = pneg %p37
      %p44 = scmp.eq.s32.totalorder %s14, 1
      %p45 = por %p43, %p44
      %p46 = scmp.ne.s32.totalorder %s38, %s41
      %p47 = scmp.eq.s32.totalorder %s14, 0
      %p48 = por %p46, %p47
      %p49 = scmp.ne.s32.totalorder %s38, %s41
      %p50 = scmp.eq.s32.totalorder %s19, 1
      %p51 = por %p49, %p50
      %p52 = scmp.ne.s32.totalorder %s41, %s42
      %p53 = scmp.eq.s32.totalorder %s19, 0
      %p54 = por %p52, %p53
      %p55 = scmp.ne.s32.totalorder %s41, %s42
      %p56 = scmp.eq.s32.totalorder %s20, 1
      %p57 = por %p55, %p56
      %p59 = scmp.ne.s32.totalorder %s42, %s58
      %p60 = scmp.eq.s32.totalorder %s20, 0
      %p61 = por %p59, %p60
      %s62 = sadd.s32 %s21, %s22
      %s63 = sadd.s32 %s33, %s29
      %s64 = ssub.s32 %s62, %s63
      %p65 = scmp.eq.s32.totalorder %s64, 0
      %s67 = sadd.s32 %s66, 1
      %s68 = scalar_select %p65, %s66, %s67
      %p71 = pneg %p65
      %p72 = scmp.eq.s32.totalorder %s14, 1
      %p73 = por %p71, %p72
      %p74 = scmp.ne.s32.totalorder %s66, %s69
      %p75 = scmp.eq.s32.totalorder %s14, 0
      %p76 = por %p74, %p75
      %p77 = scmp.ne.s32.totalorder %s66, %s69
      %p78 = scmp.eq.s32.totalorder %s19, 1
      %p79 = por %p77, %p78
      %p80 = scmp.ne.s32.totalorder %s69, %s70
      %p81 = scmp.eq.s32.totalorder %s19, 0
      %p82 = por %p80, %p81
      %p83 = scmp.ne.s32.totalorder %s69, %s70
      %p84 = scmp.eq.s32.totalorder %s20, 1
      %p85 = por %p83, %p84
      %p87 = scmp.ne.s32.totalorder %s70, %s86
      %p88 = scmp.eq.s32.totalorder %s20, 0
      %p89 = por %p87, %p88
      %s90 = ssub.s32 %s21, %s33
      %p91 = scmp.eq.s32.totalorder %s90, 0
      %s93 = sadd.s32 %s92, 1
      %s94 = scalar_select %p91, %s92, %s93
      %p97 = pneg %p91
      %p98 = scmp.eq.s32.totalorder %s14, 1
      %p99 = por %p97, %p98
      %p100 = scmp.ne.s32.totalorder %s92, %s95
      %p101 = scmp.eq.s32.totalorder %s14, 0
      %p102 = por %p100, %p101
      %p103 = scmp.ne.s32.totalorder %s92, %s95
      %p104 = scmp.eq.s32.totalorder %s19, 1
      %p105 = por %p103, %p104
      %p106 = scmp.ne.s32.totalorder %s95, %s96
      %p107 = scmp.eq.s32.totalorder %s19, 0
      %p108 = por %p106, %p107
      %p109 = scmp.ne.s32.totalorder %s95, %s96
      %p110 = scmp.eq.s32.totalorder %s20, 1
      %p111 = por %p109, %p110
      %p113 = scmp.ne.s32.totalorder %s96, %s112
      %p114 = scmp.eq.s32.totalorder %s20, 0
      %p115 = por %p113, %p114
      %p116 = scmp.le.s32.totalorder 1, %s14
      %p117 = scmp.lt.s32.totalorder %s14, 3
      %p118 = pnand %p116, %p117
      %p119 = pneg %p118
      // Predicated region
      $region9: #{tpu_custom_call.1} parent=5 // pred_check
        _
      $region10: #{tpu_custom_call.1} parent=5 // pred_check_branch
        %121 = sbr.rel (%p118) target = $region12
      $region11: #{tpu_custom_call.1} parent=5 // pred_region
        %s122 = ssub.s32 %s14, 1
      $region12: #{tpu_custom_call.1} parent=5 // pred_fallthru
        _
      %p123 = scmp.lt.s32.totalorder %s14, 2
      // Predicated region
      $region13: #{tpu_custom_call.1} parent=5 // pred_check
        %p124 = pneg %p123
      $region14: #{tpu_custom_call.1} parent=5 // pred_check_branch
        %126 = sbr.rel (%p124) target = $region16
      $region15: #{tpu_custom_call.1} parent=5 // pred_region
        // Predicated region
        $region17: #{tpu_custom_call.1} parent=15 // pred_check
          %p127 = pneg %p48
        $region18: #{tpu_custom_call.1} parent=15 // pred_check_branch
          %129 = sbr.rel (%p127) target = $region20
        $region19: #{tpu_custom_call.1} parent=15 // pred_region
          %s130 = sand.u32 %s38, 1
          %s131 = scalar_lea.sflag [#allocation3], %s130
          %s132 = sand.u32 %s38, 1
          %s133 = smul.addr %s132, 32
          %s134 = scalar_lea.vmem [#allocation2], %s133
          %s135 = sadd.s32 %s21, %s22
          %s136 = smul.u32 2, %s135
          %s137 = ssub.s32 3, %s136
          %p138 = scmp.lt.s32.totalorder %s137, 2
          %s139 = scalar_select %p138, %s137, 2
          %s140 = smul.u32 128, %s139
          %s141 = smul.u32 %s140, 2
          %s143 = ssub.s32 512, %s141
          %144 = vsyncadd %s131, %s143
          %p145 = scmp.ne.s32.totalorder 0, %s141
          %s146 = smul.addr %s136, 2
          %s147 = smul.addr %s146, 128
          %s148 = scalar_lea.hbm %s0, %s147
          %s149 = smul.u32 16, %s139
          %s150 = sshll.u32 %s134, 4
          %s151 = int_to_ptr.vmem [resolvable:$true] %s150
          %s152 = sshll.u32 %s149, 4
          %156 = dma.hbm_to_vmem [thread:$0]  (%p145), %s148, %s152, %s151, %s131, 256, 256, 16
        $region20: #{tpu_custom_call.1} parent=15 // pred_fallthru
          _
        // Predicated region
        $region21: #{tpu_custom_call.1} parent=15 // pred_check
          %p157 = pneg %p76
        $region22: #{tpu_custom_call.1} parent=15 // pred_check_branch
          %159 = sbr.rel (%p157) target = $region24
        $region23: #{tpu_custom_call.1} parent=15 // pred_region
          %s160 = sadd.s32 %s21, %s22
          %s161 = smul.u32 2, %s160
          %p162 = scmp.lt.s32.totalorder %s161, 3
          %s163 = scalar_select %p162, %s161, 3
          %s164 = smul.addr %s163, 8
          %s165 = scalar_lea.vmem %s1, %s164
          %s166 = sadd.s32 %s21, %s22
          %s167 = smul.u32 2, %s166
        $region24: #{tpu_custom_call.1} parent=15 // pred_fallthru
          _
      $region16: #{tpu_custom_call.1} parent=5 // pred_fallthru
        _
      %p168 = scmp.le.s32.totalorder 1, %s14
      %p169 = scmp.lt.s32.totalorder %s14, 3
      %p170 = pnand %p168, %p169
      %p171 = pneg %p170
      // Predicated region
      $region25: #{tpu_custom_call.1} parent=5 // pred_check
        _
      $region26: #{tpu_custom_call.1} parent=5 // pred_check_branch
        %173 = sbr.rel (%p170) target = $region28
      $region27: #{tpu_custom_call.1} parent=5 // pred_region
        %s174 = ssub.s32 %s14, 1
        %s175 = sand.u32 %s41, 1
        %s176 = scalar_lea.sflag [#allocation3], %s175
        %s177 = sand.u32 %s41, 1
        %s178 = smul.addr %s177, 32
        %s179 = scalar_lea.vmem [#allocation2], %s178
        // Predicated region
        $region29: #{tpu_custom_call.1} parent=27 // pred_check
          %p180 = pneg %p54
        $region30: #{tpu_custom_call.1} parent=27 // pred_check_branch
          %182 = sbr.rel (%p180) target = $region32
        $region31: #{tpu_custom_call.1} parent=27 // pred_region
          %183 = dma.done %s176, 512
        $region32: #{tpu_custom_call.1} parent=27 // pred_fallthru
          _
        %s184 = sand.u32 %s41, 1
        %s185 = scalar_lea.sflag [#allocation3], %s184
        %s186 = sand.u32 %s41, 1
        %s187 = smul.addr %s186, 32
        %s188 = scalar_lea.vmem [#allocation2], %s187
        %p189 = pneg %p54
        %p190 = pneg %p51
        %s191 = sadd.s32 %s23, %s24
        %s192 = smul.u32 2, %s191
        %p193 = scmp.lt.s32.totalorder %s192, 3
        %s194 = scalar_select %p193, %s192, 3
        %s195 = smul.addr %s194, 8
        %s196 = scalar_lea.vmem %s1, %s195
        %p197 = pneg %p82
        %p198 = pneg %p79
        %p199 = pneg %p108
        %p200 = pneg %p105
        %s201 = sand.u32 %s95, 1
        %s202 = scalar_lea.sflag [#allocation4], %s201
        %s203 = sand.u32 %s95, 1
        %s204 = smul.addr %s203, 2
        %s205 = scalar_lea.vmem [#allocation5], %s204
        %s206 = sadd.s32 %s23, %s24
        %s207 = smul.u32 2, %s206
        %s208 = ssub.s32 3, %s207
        %p209 = scmp.lt.s32.totalorder %s208, 2
        %s210 = scalar_select %p209, %s208, 2
        %s211 = smul.u32 128, %s210
        %s212 = smul.u32 %s211, 2
        %s213 = sadd.s32 %s23, %s24
        %s214 = smul.u32 2, %s213
        %p215 = scmp.lt.s32.totalorder %s214, 3
        %s216 = scalar_select %p215, %s214, 3
        %s217 = smul.addr %s216, 8
        %s218 = scalar_lea.vmem %s1, %s217
        %s219 = sadd.s32 %s23, %s24
        %s220 = smul.u32 2, %s219
        %p221 = scmp.eq.s32.totalorder %s24, 0
        // Predicated region
        $region33: #{tpu_custom_call.1} parent=27 // pred_check
          %p222 = pneg %p221
        $region34: #{tpu_custom_call.1} parent=27 // pred_check_branch
          %224 = sbr.rel (%p222) target = $region36
        $region35: #{tpu_custom_call.1} parent=27 // pred_region
          %v225 = vlaneseq
          %vm226 = vcmp.ge.s32.totalorder %v225, 0
          %vm227 = vcmp.lt.s32.totalorder %v225, 200
          %vm228 = vmand %vm226, %vm227
          %229 = vst.msk [vmem:[%s205] sm:$0x3] %vm228, 0.0
        $region36: #{tpu_custom_call.1} parent=27 // pred_fallthru
          _
        %v230 = vld [vmem:[%s179] sm:$0xff]
        %v231 = vld [vmem:[%s179 + $0x8] sm:$0xff]
        %v232 = vld [vmem:[%s179 + $0x10] sm:$0xff]
        %v233 = vld [vmem:[%s179 + $0x18] sm:$0xff]
        %v234 = vld [vmem:[%s218] sm:$0xff]
        %v235 = vld [vmem:[%s218 + $0x8] sm:$0xff]
        %v236 = vlaneseq
        %v237 = vand.u32 %v236, 127
        %v238 = vadd.s32 %v237, 128
        %vm239 = vcmask 588800
        %v240 = vsel %vm239, %v231, -inf
        %v241 = vmax.f32 %v230, %v240
        %242 = vmax.xlane.f32.xlu0 %v241
        %v243 = vpop.xlane.xlu0 %242
        %v244 = vsel %vm239, %v233, -inf
        %v245 = vmax.f32 %v232, %v244
        %246 = vmax.xlane.f32.xlu0 %v245
        %v247 = vpop.xlane.xlu0 %246
        %v248 = vsub.f32 %v230, %v243
        %v249 = vsub.f32 %v231, %v243
        %v250 = vsub.f32 %v232, %v247
        %v251 = vsub.f32 %v233, %v247
        %v252 = vmul.f32 %v248, 1.442695
        %v253 = vpow.pop %v252
        %v254 = vmul.f32 %v249, 1.442695
        %v255 = vpow.pop %v254
        %v256 = vmul.f32 %v250, 1.442695
        %v257 = vpow.pop %v256
        %v258 = vmul.f32 %v251, 1.442695
        %v259 = vpow.pop %v258
        %v260 = vsel %vm239, %v255, 0.0
        %v261 = vadd.f32 %v253, %v260
        %262 = vadd.xlane.f32.xlu0 %v261
        %v263 = vpop.xlane.xlu0 %262
        %v264 = vsel %vm239, %v259, 0.0
        %v265 = vadd.f32 %v257, %v264
        %266 = vadd.xlane.f32.xlu0 %v265
        %v267 = vpop.xlane.xlu0 %266
        %v268 = vlog2.pop %v263
        %v269 = vmul.f32 %v268, 0.6931472
        %v270 = vlog2.pop %v267
        %v271 = vmul.f32 %v270, 0.6931472
        %v272 = vadd.f32 %v243, %v269
        %v273 = vadd.f32 %v247, %v271
        %274 = vset.pattern.permute.xlu0 0
        %275 = vperm.xlu0 %274, %v234
        %v276 = vpop.permute.xlu0 %275
        %277 = vset.pattern.permute.xlu0 0
        %278 = vperm.xlu0 %277, %v235
        %v279 = vpop.permute.xlu0 %278
        %vm280 = vcmp.eq.s32.totalorder %v237, %v276
        %vm281 = vcmp.eq.s32.totalorder %v238, %v276
        %vm282 = vcmp.eq.s32.totalorder %v237, %v279
        %vm283 = vcmp.eq.s32.totalorder %v238, %v279
        %v284 = vsub.f32 %v272, %v230
        %v285 = vsub.f32 %v272, %v231
        %v286 = vsub.f32 %v273, %v232
        %v287 = vsub.f32 %v273, %v233
        %v288 = vsel %vm280, %v284, 0.0
        %v289 = vsel %vm281, %v285, 0.0
        %v290 = vsel %vm282, %v286, 0.0
        %v291 = vsel %vm283, %v287, 0.0
        %v292 = vld [vmem:[%s205] sm:$0x3]
        %v293 = vadd.f32 %v288, %v290
        %v294 = vrot.slane %v293, 4
        %v295 = vadd.f32 %v293, %v294
        %v296 = vrot.slane %v295, 2
        %v297 = vadd.f32 %v295, %v296
        %v298 = vrot.slane %v297, 1
        %v299 = vadd.f32 %v297, %v298
        %v300 = vsel %vm239, %v289, 0.0
        %v301 = vsel %vm239, %v291, 0.0
        %v302 = vadd.f32 %v300, %v301
        %v303 = vrot.slane %v302, 4
        %v304 = vadd.f32 %v302, %v303
        %v305 = vrot.slane %v304, 2
        %v306 = vadd.f32 %v304, %v305
        %v307 = vrot.slane %v306, 1
        %v308 = vadd.f32 %v306, %v307
        %v311 = vcombine.low %v299, %v308
        %v313 = vunpack.c.l.s4 1966171168
        %v314 = vunpack.c.0.s8 %v313
        %v315 = vlaneseq
        %v316 = vshrl.u32 %v315, 7
        %v317 = vsub.s32 %v314, %v316
        %v318 = vrot.slane %v311, %v317
        %v320 = vunpack.c.l.s4 1966171168
        %v321 = vunpack.c.0.s8 %v320
        %v322 = vlaneseq
        %v323 = vshrl.u32 %v322, 7
        %v324 = vsub.s32 %v321, %v323
        %v325 = vrot.slane %v318, %v324
        %v327 = vadd.f32 %v292, %v325
        %v328 = vlaneseq
        %vm329 = vcmp.ge.s32.totalorder %v328, 0
        %vm330 = vcmp.lt.s32.totalorder %v328, 200
        %vm331 = vmand %vm329, %vm330
        %332 = vst.msk [vmem:[%s205] sm:$0x3] %vm331, %v327
        %s333 = sand.u32 %s95, 1
        %s334 = scalar_lea.sflag [#allocation4], %s333
        %s335 = sand.u32 %s95, 1
        %s336 = smul.addr %s335, 2
        %s337 = scalar_lea.vmem [#allocation5], %s336
        // Predicated region
        $region37: #{tpu_custom_call.1} parent=27 // pred_check
          %p338 = pneg %p105
        $region38: #{tpu_custom_call.1} parent=27 // pred_check_branch
          %340 = sbr.rel (%p338) target = $region40
        $region39: #{tpu_custom_call.1} parent=27 // pred_region
          %s342 = ssub.s32 32, 32
          %343 = vsyncadd %s334, %s342
          %s344 = smul.addr %s23, 2
          %s345 = smul.addr %s344, 16
          %s346 = scalar_lea.hbm %s2, %s345
          %s348 = sshll.u32 %s337, 4
          %s349 = int_to_ptr.vmem [resolvable:$true] %s348
          %351 = dma.vmem_to_hbm [thread:$0]  %s349, 32, %s346, %s334
        $region40: #{tpu_custom_call.1} parent=27 // pred_fallthru
          _
      $region28: #{tpu_custom_call.1} parent=5 // pred_fallthru
        _
      %p352 = scmp.le.s32.totalorder 2, %s14
      // Predicated region
      $region41: #{tpu_custom_call.1} parent=5 // pred_check
        %p353 = pneg %p352
      $region42: #{tpu_custom_call.1} parent=5 // pred_check_branch
        %355 = sbr.rel (%p353) target = $region44
      $region43: #{tpu_custom_call.1} parent=5 // pred_region
        %s356 = ssub.s32 %s14, 2
        // Predicated region
        $region45: #{tpu_custom_call.1} parent=43 // pred_check
          %p357 = pneg %p111
        $region46: #{tpu_custom_call.1} parent=43 // pred_check_branch
          %359 = sbr.rel (%p357) target = $region48
        $region47: #{tpu_custom_call.1} parent=43 // pred_region
          %s360 = sand.u32 %s96, 1
          %s361 = scalar_lea.sflag [#allocation4], %s360
          %s362 = sand.u32 %s96, 1
          %s363 = smul.addr %s362, 2
          %s364 = scalar_lea.vmem [#allocation5], %s363
          %365 = dma.done %s361, 32
        $region48: #{tpu_custom_call.1} parent=43 // pred_fallthru
          _
      $region44: #{tpu_custom_call.1} parent=5 // pred_fallthru
        _
    $region6: #{tpu_custom_call.1} parent=1 // loop_footer
      %s18 = sadd.s32 1, %s14
    $region7: #{tpu_custom_call.1} parent=1 // loop_footer_branch
      %13 = sbr.rel target = $region3
    $region8: #{tpu_custom_call.1} parent=1 // loop_exit
      _
    %366 = vsyncpa [#allocation3], 1
    %s367 = scalar_lea.sflag [#allocation3], 1
    %368 = vsyncpa %s367, 1
    %369 = vsyncpa [#allocation4], 1
    %s370 = scalar_lea.sflag [#allocation4], 1
    %371 = vsyncpa %s370, 1

</llo_original>
